<compile_context>
chip_gen: v5e
topology: v5e:2x2
jax: 0.10.0
libtpu: 0.0.40
codegen_flags: <defaults>
</compile_context>

<pallas_src>
import functools

import jax
import jax.numpy as jnp
from jax.experimental import pallas as pl
from jax.experimental.pallas import tpu as pltpu


def _round_up(x, m):
    return ((x + m - 1) // m) * m


def _focal_loss_kernel(x_ref, tgt_ref, out_ref, *, alpha, gamma, k, num_class,
                       total_rows, partial_sum):
    """One batch tile.

    x_ref   : (TB, k*C) probabilities, input dtype (k logical rows per lane row)
    tgt_ref : (TB, k)   int32 class index per packed logical row
    out_ref : (1, 128)  per-tile partial sum  (reduction mean/sum)
              (TB, k)   per-row focal loss    (reduction none)
    """
    x = x_ref[...]                       # keep input dtype -- no full-tile cast
    tb, width = x.shape
    lane = jax.lax.broadcasted_iota(jnp.int32, (tb, width), 1)

    # Gather-first: select the target-class probability for every logical row.
    cols = []
    for j in range(k):
        tgt_j = tgt_ref[:, j:j + 1]
        if j:
            tgt_j = tgt_j + j * num_class
        sel = jnp.where(lane == tgt_j, x, jnp.zeros_like(x))
        # Exactly one non-zero element per row -> the sum is exact in any dtype.
        cols.append(jnp.sum(sel, axis=1, keepdims=True))          # (TB, 1)
    p_t = cols[0] if k == 1 else jnp.concatenate(cols, axis=1)    # (TB, k)

    # Focal expression on the gathered columns only (f32 from here on).
    p_t = p_t.astype(jnp.float32) + 1e-6
    one_minus = 1.0 - p_t
    g = float(gamma)
    if g == int(g) and g >= 0.0:
        weight = one_minus ** int(g)     # exact integer_pow (matches torch.pow)
    else:
        weight = jnp.exp(jnp.float32(g) * jnp.log(one_minus))
    focal = (-jnp.float32(alpha)) * weight * jnp.log(p_t)         # (TB, k) f32

    if total_rows is not None:
        # Ragged last tile: zero logical rows >= B (those lanes read OOB junk).
        row = (pl.program_id(0) * tb * k
               + jax.lax.broadcasted_iota(jnp.int32, (tb, k), 0) * k
               + jax.lax.broadcasted_iota(jnp.int32, (tb, k), 1))
        focal = jnp.where(row < total_rows, focal, 0.0)

    if partial_sum:
        tile_sum = jnp.sum(jnp.sum(focal, axis=1, keepdims=True),
                           axis=0, keepdims=True)                 # (1, 1)
        out_ref[...] = jnp.broadcast_to(tile_sum, out_ref.shape)  # lane-dense
    else:
        out_ref[...] = focal


def focal_loss(output, target, alpha=1.0, gamma=2.0, reduction="mean",
               _max_tile_rows=None):
    """Pallas FocalLoss forward. output: (B, C) float, target: (B,) int.

    `_max_tile_rows` is a test/tuning hook that caps the batch-tile row count
    (used below to exercise multi-tile / ragged-tail paths at small shapes).
    """
    if reduction not in ("none", "mean", "sum"):
        raise NotImplementedError(f"Invalid reduction mode: {reduction}")

    b, c = output.shape
    in_dtype = output.dtype
    itemsize = jnp.dtype(in_dtype).itemsize

    # ---- Small-C packing: k logical rows per lane row (free, contiguous). ----
    k = 1
    if c < 128:
        k_cand = max(1, min(128 // c, 16))
        if k_cand > 1 and b % k_cand == 0:
            k = k_cand
    rows, width = b // k, k * c
    x = output.reshape(rows, width) if k > 1 else output
    tgt = target.astype(jnp.int32).reshape(rows, k)

    # ---- Tile sizing from layout-padded VMEM footprints (no input pad). -----
    try:
        vmem_cap = int(pltpu.get_tpu_info().vmem_capacity_bytes)
    except Exception:                       # conservative fallback
        vmem_cap = 64 << 20
    # v7x: 64 MiB VMEM/TC -> keep total buffering ~40 MiB; v5e/v6e: 128 MiB.
    total_budget = (40 << 20) if vmem_cap <= (64 << 20) else (48 << 20)

    in_row = _round_up(width, 128) * itemsize     # padded input bytes / tile row
    tgt_row = 128 * 4                             # (TB, k) int32 pads to 128 lanes
    out_row = 128 * 4 if reduction == "none" else 0
    per_row = 2 * (in_row + tgt_row + out_row)    # x2: double-buffered pipeline

    tb = max(8, total_budget // per_row)
    if _max_tile_rows is not None:
        tb = min(tb, max(8, int(_max_tile_rows)))
    tb = (tb // 128) * 128 if tb >= 128 else max(8, (tb // 8) * 8)
    if rows <= tb:
        tb = rows                                  # single tile == full array dims
    n_tiles = pl.cdiv(rows, tb)

    # Mask ragged last tile in-kernel instead of padding the input in HBM.
    total_rows = b if n_tiles * tb * k != b else None

    partial_sum = reduction in ("mean", "sum")
    if partial_sum:
        out_shape = jax.ShapeDtypeStruct((n_tiles, 128), jnp.float32)
        out_spec = pl.BlockSpec((1, 128), lambda i: (i, 0))
        out_bytes = n_tiles * 128 * 4
    else:
        out_shape = jax.ShapeDtypeStruct((rows, k), jnp.float32)
        out_spec = pl.BlockSpec((tb, k), lambda i: (i, 0))
        out_bytes = rows * k * 4

    kernel = functools.partial(
        _focal_loss_kernel, alpha=float(alpha), gamma=float(gamma), k=k,
        num_class=c, total_rows=total_rows, partial_sum=partial_sum)

    # Explicit VMEM budget from padded shapes; above v5e's 16 MiB scoped
    # default, below physical VMEM on every generation.
    vmem_need = _round_up(tb, 32) * per_row + 4 * 8 * 128 * 4 + (1 << 20)
    vmem_limit = int(min(max(vmem_need, 16 << 20), vmem_cap - (4 << 20)))

    cost = pl.CostEstimate(
        flops=int(3 * rows * _round_up(width, 128) * k + 12 * b),
        transcendentals=int(2 * b),
        bytes_accessed=int(rows * width * itemsize + b * 4 + out_bytes),
    )

    out = pl.pallas_call(
        kernel,
        out_shape=out_shape,
        grid_spec=pltpu.PrefetchScalarGridSpec(
            num_scalar_prefetch=0,
            grid=(n_tiles,),
            in_specs=[
                pl.BlockSpec((tb, width), lambda i: (i, 0)),  # probabilities
                pl.BlockSpec((tb, k), lambda i: (i, 0)),      # packed targets
            ],
            out_specs=out_spec,
        ),
        compiler_params=pltpu.CompilerParams(
            # Batch tiles are independent; on v7x both TensorCores can split
            # this axis (use pltpu.CORE_PARALLEL if a profile shows one idle).
            dimension_semantics=("parallel",),
            vmem_limit_bytes=vmem_limit,
        ),
        cost_estimate=cost,
    )(x, tgt)

    if reduction == "none":
        return out.reshape(-1)[:b]
    loss_sum = jnp.sum(out[:, 0])            # one lane-dense row per tile
    if reduction == "mean":
        return loss_sum / jnp.float32(b)
    return loss_sum


def _focal_loss_ref(output, target, alpha=1.0, gamma=2.0, reduction="mean"):
    """Pure-JAX reference matching the PyTorch module."""
    x = output.astype(jnp.float32) + 1e-6
    one_hot = jax.nn.one_hot(target, output.shape[1], dtype=jnp.float32)
    weight = jnp.power(1.0 - x, gamma)
    focal = -alpha * weight * jnp.log(x)
    loss_tmp = jnp.sum(one_hot * focal, axis=1)
    if reduction == "none":
        return loss_tmp
    if reduction == "mean":
        return jnp.mean(loss_tmp)
    return jnp.sum(loss_tmp)


if __name__ == "__main__":
    key = jax.random.PRNGKey(0)
    # Case 1: packed small-C path (k=4), single exact tile.
    # Case 2: packed path with a capped tile -> multi-tile + ragged masked tail.
    # Case 3: C >= 128 (unpacked) with ragged masked tail.
    cases = [
        dict(b=8, c=32, cap=None),
        dict(b=40, c=32, cap=8),
        dict(b=37, c=200, cap=8),
    ]
    ok = True
    for case in cases:
        key, k_log, k_tgt = jax.random.split(key, 3)
        logits = jax.random.normal(k_log, (case["b"], case["c"]),
                                   dtype=jnp.float32)
        probs = jax.nn.softmax(logits, axis=-1)   # FocalLoss expects probabilities
        target = jax.random.randint(k_tgt, (case["b"],), 0, case["c"],
                                    dtype=jnp.int32)
        for reduction in ("mean", "sum", "none"):
            got = jax.block_until_ready(
                focal_loss(probs, target, alpha=1.0, gamma=2.0,
                           reduction=reduction, _max_tile_rows=case["cap"]))
            ref = _focal_loss_ref(probs, target, alpha=1.0, gamma=2.0,
                                  reduction=reduction)
            ok = ok and bool(jnp.allclose(got, ref, rtol=1e-5, atol=1e-5))
    assert ok, "Pallas focal loss does not match the pure-JAX reference"
    print("KERNEL_OK")
</pallas_src>

<mosaic_0001>
module attributes {stable_mosaic.version = 11 : i64} {
  func.func @_focal_loss_kernel(%arg0: i32, %arg1: memref<2x128xf32, #tpu.memory_space<vmem>>, %arg2: memref<2x4xi32, #tpu.memory_space<vmem>>, %arg3: memref<1x128xf32, #tpu.memory_space<vmem>>) attributes {dimension_semantics = [#tpu.dimension_semantics<parallel>], iteration_bounds = array<i64: 1>, scalar_prefetch = 0 : i64, scratch_operands = 0 : i64, tpu.core_type = #tpu.core_type<tc>, window_params = [{transform_indices = @transform_0, window_bounds = array<i64: 2, 128>}, {transform_indices = @transform_1, window_bounds = array<i64: 2, 4>}, {transform_indices = @transform_2, window_bounds = array<i64: 1, 128>}]} {
    %c0 = arith.constant 0 : index
    %c0_0 = arith.constant 0 : index
    %0 = vector.load %arg1[%c0, %c0_0] : memref<2x128xf32, #tpu.memory_space<vmem>>, vector<2x128xf32>
    %1 = tpu.iota {dimensions = array<i32: 1>} : vector<2x128xi32>
    %c0_1 = arith.constant 0 : index
    %c0_2 = arith.constant 0 : index
    %2 = vector.load %arg2[%c0_1, %c0_2] : memref<2x4xi32, #tpu.memory_space<vmem>>, vector<2x1xi32>
    %3 = vector.broadcast %2 : vector<2x1xi32> to vector<2x128xi32>
    %4 = arith.cmpi eq, %1, %3 : vector<2x128xi32>
    %cst = arith.constant 0.000000e+00 : f32
    %5 = vector.broadcast %cst : f32 to vector<2x128xf32>
    %6 = arith.select %4, %0, %5 : vector<2x128xi1>, vector<2x128xf32>
    %cst_3 = arith.constant dense<0.000000e+00> : vector<2xf32>
    %7 = vector.multi_reduction <add>, %6, %cst_3 [1] : vector<2x128xf32> to vector<2xf32>
    %8 = vector.shape_cast %7 : vector<2xf32> to vector<2x1xf32>
    %c0_4 = arith.constant 0 : index
    %c1 = arith.constant 1 : index
    %9 = vector.load %arg2[%c0_4, %c1] : memref<2x4xi32, #tpu.memory_space<vmem>>, vector<2x1xi32>
    %c32_i32 = arith.constant 32 : i32
    %10 = vector.broadcast %c32_i32 : i32 to vector<2x1xi32>
    %11 = arith.addi %9, %10 : vector<2x1xi32>
    %12 = vector.broadcast %11 : vector<2x1xi32> to vector<2x128xi32>
    %13 = arith.cmpi eq, %1, %12 : vector<2x128xi32>
    %cst_5 = arith.constant 0.000000e+00 : f32
    %14 = vector.broadcast %cst_5 : f32 to vector<2x128xf32>
    %15 = arith.select %13, %0, %14 : vector<2x128xi1>, vector<2x128xf32>
    %cst_6 = arith.constant dense<0.000000e+00> : vector<2xf32>
    %16 = vector.multi_reduction <add>, %15, %cst_6 [1] : vector<2x128xf32> to vector<2xf32>
    %17 = vector.shape_cast %16 : vector<2xf32> to vector<2x1xf32>
    %c0_7 = arith.constant 0 : index
    %c2 = arith.constant 2 : index
    %18 = vector.load %arg2[%c0_7, %c2] : memref<2x4xi32, #tpu.memory_space<vmem>>, vector<2x1xi32>
    %c64_i32 = arith.constant 64 : i32
    %19 = vector.broadcast %c64_i32 : i32 to vector<2x1xi32>
    %20 = arith.addi %18, %19 : vector<2x1xi32>
    %21 = vector.broadcast %20 : vector<2x1xi32> to vector<2x128xi32>
    %22 = arith.cmpi eq, %1, %21 : vector<2x128xi32>
    %cst_8 = arith.constant 0.000000e+00 : f32
    %23 = vector.broadcast %cst_8 : f32 to vector<2x128xf32>
    %24 = arith.select %22, %0, %23 : vector<2x128xi1>, vector<2x128xf32>
    %cst_9 = arith.constant dense<0.000000e+00> : vector<2xf32>
    %25 = vector.multi_reduction <add>, %24, %cst_9 [1] : vector<2x128xf32> to vector<2xf32>
    %26 = vector.shape_cast %25 : vector<2xf32> to vector<2x1xf32>
    %c0_10 = arith.constant 0 : index
    %c3 = arith.constant 3 : index
    %27 = vector.load %arg2[%c0_10, %c3] : memref<2x4xi32, #tpu.memory_space<vmem>>, vector<2x1xi32>
    %c96_i32 = arith.constant 96 : i32
    %28 = vector.broadcast %c96_i32 : i32 to vector<2x1xi32>
    %29 = arith.addi %27, %28 : vector<2x1xi32>
    %30 = vector.broadcast %29 : vector<2x1xi32> to vector<2x128xi32>
    %31 = arith.cmpi eq, %1, %30 : vector<2x128xi32>
    %cst_11 = arith.constant 0.000000e+00 : f32
    %32 = vector.broadcast %cst_11 : f32 to vector<2x128xf32>
    %33 = arith.select %31, %0, %32 : vector<2x128xi1>, vector<2x128xf32>
    %cst_12 = arith.constant dense<0.000000e+00> : vector<2xf32>
    %34 = vector.multi_reduction <add>, %33, %cst_12 [1] : vector<2x128xf32> to vector<2xf32>
    %35 = vector.shape_cast %34 : vector<2xf32> to vector<2x1xf32>
    %36 = tpu.concatenate %8, %17, %26, %35 in 1 : vector<2x1xf32>, vector<2x1xf32>, vector<2x1xf32>, vector<2x1xf32> -> vector<2x4xf32>
    %cst_13 = arith.constant 9.99999997E-7 : f32
    %37 = vector.broadcast %cst_13 : f32 to vector<2x4xf32>
    %38 = arith.addf %36, %37 : vector<2x4xf32>
    %cst_14 = arith.constant 1.000000e+00 : f32
    %39 = vector.broadcast %cst_14 : f32 to vector<2x4xf32>
    %40 = arith.subf %39, %38 : vector<2x4xf32>
    %41 = arith.mulf %40, %40 : vector<2x4xf32>
    %cst_15 = arith.constant 0.000000e+00 : f32
    %cst_16 = arith.constant 1.000000e+00 : f32
    %42 = arith.subf %cst_15, %cst_16 : f32
    %43 = vector.broadcast %42 : f32 to vector<2x4xf32>
    %44 = arith.mulf %43, %41 : vector<2x4xf32>
    %45 = math.log %38 : vector<2x4xf32>
    %46 = arith.mulf %44, %45 : vector<2x4xf32>
    %cst_17 = arith.constant dense<0.000000e+00> : vector<2xf32>
    %47 = vector.multi_reduction <add>, %46, %cst_17 [1] : vector<2x4xf32> to vector<2xf32>
    %48 = vector.shape_cast %47 : vector<2xf32> to vector<2x1xf32>
    %cst_18 = arith.constant dense<0.000000e+00> : vector<1xf32>
    %49 = vector.multi_reduction <add>, %48, %cst_18 [0] : vector<2x1xf32> to vector<1xf32>
    %50 = vector.shape_cast %49 : vector<1xf32> to vector<1x1xf32>
    %51 = vector.shape_cast %50 : vector<1x1xf32> to vector<1x1xf32>
    %52 = vector.broadcast %51 : vector<1x1xf32> to vector<1x128xf32>
    %c0_19 = arith.constant 0 : index
    %c0_20 = arith.constant 0 : index
    %53 = vector.load %arg3[%c0_19, %c0_20] : memref<1x128xf32, #tpu.memory_space<vmem>>, vector<1x128xf32>
    tpu.vector_store %arg3[%c0_19, %c0_20], %52 {strides = array<i32>} : memref<1x128xf32, #tpu.memory_space<vmem>>, vector<1x128xf32>,
    return
  }
  func.func @transform_0(%arg0: i32) -> (i32, i32) {
    %c0_i32 = arith.constant 0 : i32
    %c0_i32_0 = arith.constant 0 : i32
    return %arg0, %c0_i32 : i32, i32
  }
  func.func @transform_1(%arg0: i32) -> (i32, i32) {
    %c0_i32 = arith.constant 0 : i32
    %c0_i32_0 = arith.constant 0 : i32
    return %arg0, %c0_i32 : i32, i32
  }
  func.func @transform_2(%arg0: i32) -> (i32, i32) {
    %c0_i32 = arith.constant 0 : i32
    %c0_i32_0 = arith.constant 0 : i32
    return %arg0, %c0_i32 : i32, i32
  }
}

</mosaic_0001>

<llo_original>
// kernel: tpu_custom_call.1
$region0: #{tpu_custom_call.1}
  #allocation0 [shape = 'u32[]', space=smem, size = 0x4, offset = 0x4, fixed_abs, tag = 'smem constant byte address 0x4 - core index']
  #allocation1 [shape = 'u32[72,128]{1,0:T(1,128)}', space=vmem, size = 0x9000, scoped, tag = 'internal scratch']
  %s0 = inlined_call_operand.hbm [shape: f32[2,128], index: 0, kind: input, shape index: {}]
  %s1 = inlined_call_operand.hbm [shape: s32[2,4], index: 1, kind: input, shape index: {}]
  %s2 = inlined_call_operand.hbm [shape: f32[1,128], index: 2, kind: output, shape index: {}]
  %s3 = sld [smem:[#allocation0]]
  $region26: #{tpu_custom_call.1} parent=0
    _
  %s5 = ssub.s32 1, %s3
  %s6 = scalar_select 0, %s5, %s3
  $region1: #{tpu_custom_call.1} parent=0
    #allocation2 [shape = 'u8[1024]{0}', space=vmem, size = 0x400, scoped, tag = 'input window, operand 0, single buffered']
    #allocation3 [shape = 's32[1]{0}', space=sflag, size = 0x4, scoped, tag = 'scoped memory for tpu_custom_call.1']
    #allocation4 [shape = 's32[1]{0}', space=sflag, size = 0x4, scoped, tag = 'scoped memory for tpu_custom_call.1']
    #allocation5 [shape = 'u8[1024]{0}', space=vmem, size = 0x400, scoped, tag = 'input window, operand 1, single buffered']
    #allocation6 [shape = 's32[1]{0}', space=sflag, size = 0x4, scoped, tag = 'scoped memory for tpu_custom_call.1']
    #allocation7 [shape = 'u8[512]{0}', space=vmem, size = 0x400, scoped, tag = 'output window, operand 0, single buffered']
    %7 = vsyncpa [#allocation3], 0
    %8 = vsyncpa [#allocation6], 0
    %9 = vsyncpa [#allocation4], 0
    // Predicated region
    $region2: #{tpu_custom_call.1} parent=1 // pred_check
      _
    $region3: #{tpu_custom_call.1} parent=1 // pred_check_branch
      %11 = sbr.rel (0) target = $region5
    $region4: #{tpu_custom_call.1} parent=1 // pred_region
      %13 = vsyncadd [#allocation3], 0
      %s15 = sshll.u32 %s0, 4
      %s16 = int_to_ptr.hbm [resolvable:$true] %s15
      %s17 = sshll.u32 [#allocation2], 4
      %s18 = int_to_ptr.vmem [resolvable:$true] %s17
      %20 = dma.hbm_to_vmem [thread:$0]  %s16, 32, %s18, [#allocation3]
    $region5: #{tpu_custom_call.1} parent=1 // pred_fallthru
      _
    // Predicated region
    $region6: #{tpu_custom_call.1} parent=1 // pred_check
      _
    $region7: #{tpu_custom_call.1} parent=1 // pred_check_branch
      %22 = sbr.rel (0) target = $region9
    $region8: #{tpu_custom_call.1} parent=1 // pred_region
      %24 = vsyncadd [#allocation6], 0
      %s26 = sshll.u32 %s1, 4
      %s27 = int_to_ptr.hbm [resolvable:$true] %s26
      %s28 = sshll.u32 [#allocation5], 4
      %s29 = int_to_ptr.vmem [resolvable:$true] %s28
      %31 = dma.hbm_to_vmem [thread:$0]  %s27, 32, %s29, [#allocation6]
    $region9: #{tpu_custom_call.1} parent=1 // pred_fallthru
      _
    // Predicated region
    $region10: #{tpu_custom_call.1} parent=1 // pred_check
      _
    $region11: #{tpu_custom_call.1} parent=1 // pred_check_branch
      %33 = sbr.rel (0) target = $region13
    $region12: #{tpu_custom_call.1} parent=1 // pred_region
      %35 = dma.done [#allocation3], 32
    $region13: #{tpu_custom_call.1} parent=1 // pred_fallthru
      _
    // Predicated region
    $region14: #{tpu_custom_call.1} parent=1 // pred_check
      _
    $region15: #{tpu_custom_call.1} parent=1 // pred_check_branch
      %37 = sbr.rel (0) target = $region17
    $region16: #{tpu_custom_call.1} parent=1 // pred_region
      %39 = dma.done [#allocation6], 32
    $region17: #{tpu_custom_call.1} parent=1 // pred_fallthru
      _
    %v40 = vld [vmem:[#allocation2] sm:$0x3]
    %v41 = vlaneseq
    %v42 = vand.u32 %v41, 127
    %v43 = vld [vmem:[#allocation5] sm:$0x3]
    %44 = vset.pattern.permute.xlu0 0
    %45 = vperm.xlu0 %44, %v43
    %v46 = vpop.permute.xlu0 %45
    %vm47 = vcmp.eq.s32.totalorder %v42, %v46
    %v48 = vsel %vm47, %v40, 0.0
    %vm49 = vcmask 1041408
    %v50 = vsel %vm49, %v48, 0.0
    %51 = vadd.xlane.f32.xlu0 %v50
    %v52 = vpop.xlane.xlu0 %51
    %v53 = vadd.s32 %v43, 32
    %54 = vset.pattern.permute.xlu0 1
    %55 = vperm.xlu0 %54, %v53
    %v56 = vpop.permute.xlu0 %55
    %vm57 = vcmp.eq.s32.totalorder %v42, %v56
    %v58 = vsel %vm57, %v40, 0.0
    %v59 = vsel %vm49, %v58, 0.0
    %60 = vadd.xlane.f32.xlu0 %v59
    %v61 = vpop.xlane.xlu0 %60
    %v62 = vadd.s32 %v43, 64
    %63 = vset.pattern.permute.xlu0 2
    %64 = vperm.xlu0 %63, %v62
    %v65 = vpop.permute.xlu0 %64
    %vm66 = vcmp.eq.s32.totalorder %v42, %v65
    %v67 = vsel %vm66, %v40, 0.0
    %v68 = vsel %vm49, %v67, 0.0
    %69 = vadd.xlane.f32.xlu0 %v68
    %v70 = vpop.xlane.xlu0 %69
    %v71 = vadd.s32 %v43, 96
    %72 = vset.pattern.permute.xlu0 3
    %73 = vperm.xlu0 %72, %v71
    %v74 = vpop.permute.xlu0 %73
    %vm75 = vcmp.eq.s32.totalorder %v42, %v74
    %v76 = vsel %vm75, %v40, 0.0
    %v77 = vsel %vm49, %v76, 0.0
    %78 = vadd.xlane.f32.xlu0 %v77
    %v79 = vpop.xlane.xlu0 %78
    %vm80 = vcmask 7168
    %v81 = vsel %vm80, %v52, %v61
    %vm82 = vcmask 15360
    %v83 = vsel %vm82, %v81, %v70
    %vm84 = vcmask 23552
    %v85 = vsel %vm84, %v83, %v79
    %v86 = vadd.f32 %v85, 1e-06
    %v87 = vsub.f32 1.0, %v86
    %v88 = vmul.f32 %v87, %v87
    %v89 = vmul.f32 %v88, -1.0
    %v90 = vlog2.pop %v86
    %v91 = vmul.f32 %v90, 0.6931472
    %v92 = vmul.f32 %v89, %v91
    %vm93 = vcmask 25600
    %v94 = vsel %vm93, %v92, 0.0
    %95 = vadd.xlane.f32.xlu0 %v94
    %v96 = vpop.xlane.xlu0 %95
    %v97 = vsel %vm49, %v96, 0.0
    %v98 = vrot.slane %v97, 4
    %v99 = vadd.f32 %v97, %v98
    %v100 = vrot.slane %v99, 2
    %v101 = vadd.f32 %v99, %v100
    %v102 = vrot.slane %v101, 1
    %v103 = vadd.f32 %v101, %v102
    %104 = vst [vmem:[#allocation7] sm:$0x1] %v103
    // Predicated region
    $region18: #{tpu_custom_call.1} parent=1 // pred_check
      _
    $region19: #{tpu_custom_call.1} parent=1 // pred_check_branch
      %106 = sbr.rel (0) target = $region21
    $region20: #{tpu_custom_call.1} parent=1 // pred_region
      %108 = vsyncadd [#allocation4], 0
      %s110 = sshll.u32 [#allocation7], 4
      %s111 = int_to_ptr.vmem [resolvable:$true] %s110
      %s112 = sshll.u32 %s2, 4
      %s113 = int_to_ptr.hbm [resolvable:$true] %s112
      %115 = dma.vmem_to_hbm [thread:$0]  %s111, 16, %s113, [#allocation4]
    $region21: #{tpu_custom_call.1} parent=1 // pred_fallthru
      _
    // Predicated region
    $region22: #{tpu_custom_call.1} parent=1 // pred_check
      _
    $region23: #{tpu_custom_call.1} parent=1 // pred_check_branch
      %117 = sbr.rel (0) target = $region25
    $region24: #{tpu_custom_call.1} parent=1 // pred_region
      %119 = dma.done [#allocation4], 16
    $region25: #{tpu_custom_call.1} parent=1 // pred_fallthru
      _
    %120 = vsyncpa [#allocation3], 1
    %121 = vsyncpa [#allocation6], 1
    %122 = vsyncpa [#allocation4], 1

</llo_original>
